<compile_context>
chip_gen: v5e
topology: v5e:2x2
jax: 0.10.0
libtpu: 0.0.40
codegen_flags: <defaults>
</compile_context>

<pallas_src>
import jax
import jax.numpy as jnp
from jax.experimental import pallas as pl
from jax.experimental.pallas import tpu as pltpu


def _round_up(x, m):
    return (x + m - 1) // m * m


def _round_down(x, m):
    return x // m * m


# Pipeline working-set budget (x/out double buffers, f32 temporaries,
# single-buffered weights).  12 MiB fits the smallest default scoped VMEM
# (v5e: 16 MiB) and is far under v7x's 64 MiB physical VMEM.
_VMEM_PIPELINE_BUDGET = 12 << 20
# Explicit per-kernel VMEM limit (headroom over the budget + compiler scratch);
# legal on v5e/v6e (128 MiB physical) and v7x (64 MiB physical).
_VMEM_LIMIT_BYTES = 32 << 20


def make_res_conv1d_params(w1, b1, w2, b2, *, compute_dtype=None):
    """One-time parameter prep — call at layer construction, NOT per step.

    Casts weights to the MXU compute dtype (use jnp.bfloat16 for full MXU
    throughput) and biases to f32 row vectors, so the per-call wrapper does
    no weight-side HBM work at all.
    """
    nx, nf = w1.shape
    if nx != nf:
        raise ValueError("ResConv1D residual add requires nf == nx")
    if w2.shape != (nx, nf) or b1.shape != (nf,) or b2.shape != (nf,):
        raise ValueError("inconsistent parameter shapes")
    cd = jnp.dtype(compute_dtype) if compute_dtype is not None else jnp.asarray(w1).dtype
    return (
        jnp.asarray(w1, cd),
        jnp.asarray(b1, jnp.float32).reshape(1, nf),
        jnp.asarray(w2, cd),
        jnp.asarray(b2, jnp.float32).reshape(1, nf),
    )


def _res_conv1d_kernel(x_ref, w1_ref, b1_ref, w2_ref, b2_ref, o_ref):
    # x_ref/o_ref: (tm, D); w*_ref: (D, D) in compute dtype; b*_ref: (1, D) f32.
    x = x_ref[...]
    w1 = w1_ref[...]
    w2 = w2_ref[...]

    # Matmuls run in the weight dtype (bf16 if prepared that way) with f32
    # accumulation; bias / relu / residual stay in f32.
    h = jnp.dot(x.astype(w1.dtype), w1, preferred_element_type=jnp.float32)
    h = jnp.maximum(h + b1_ref[...], 0.0)

    z = jnp.dot(h.astype(w2.dtype), w2, preferred_element_type=jnp.float32)
    z = z + b2_ref[...]

    o_ref[...] = (x.astype(jnp.float32) + z).astype(o_ref.dtype)


def res_conv1d(x, params, *, tile_m=1024, core_parallel=False):
    """Fused ResConv1D (rf=1): out = x + relu(x @ w1 + b1) @ w2 + b2.

    `params` must come from `make_res_conv1d_params` (one-time prep).
    """
    w1, b1, w2, b2 = params
    orig_shape = x.shape
    D = orig_shape[-1]
    if w1.shape != (D, D):
        raise ValueError(f"x feature dim {D} does not match weight shape {w1.shape}")

    x2d = x.reshape(-1, D)
    M = x2d.shape[0]

    x_itemsize = jnp.dtype(x.dtype).itemsize
    w_itemsize = jnp.dtype(w1.dtype).itemsize
    sublane = max(8, 32 // x_itemsize)           # 8 rows (f32) / 16 rows (bf16)

    # Row tile: as large as the VMEM budget allows (amortizes ~0.35 us/step
    # grid overhead), capped by tile_m and the row-aligned problem size.
    per_row = D * (4 * x_itemsize + 3 * 4)       # x/out double buffers + f32 temps
    fixed = 2 * D * D * w_itemsize + 2 * D * 4   # single-buffered weights + biases
    row_budget = max(_VMEM_PIPELINE_BUDGET - fixed, sublane * per_row)
    tm = _round_down(row_budget // per_row, sublane)
    tm = int(max(sublane, min(tm, tile_m, _round_up(M, sublane))))

    Mp = _round_up(M, tm)
    grid = (Mp // tm,)

    # Pad rows only (never the feature dim) and only when actually needed, so
    # aligned inputs incur zero extra HBM pad/slice traffic.
    xp = x2d if Mp == M else jnp.pad(x2d, ((0, Mp - M), (0, 0)))

    cost = pl.CostEstimate(
        flops=4 * M * D * D,                      # two (M,D)x(D,D) matmuls
        transcendentals=0,
        bytes_accessed=2 * M * D * x_itemsize + 2 * D * D * w_itemsize + 2 * D * 4,
    )

    # Weights/biases never change across row tiles -> constant index map and a
    # single buffer (no wasted double-buffer VMEM).
    const_idx = lambda i: (0, 0)
    def weight_spec(shape):
        return pl.BlockSpec(shape, const_idx, pipeline_mode=pl.Buffered(1))

    # CORE_PARALLEL actually splits row tiles across v7x's 2 TensorCores
    # (needs >= 2 grid steps); plain "parallel" otherwise.
    semantics = (pltpu.CORE_PARALLEL,) if core_parallel else ("parallel",)

    out = pl.pallas_call(
        _res_conv1d_kernel,
        out_shape=jax.ShapeDtypeStruct((Mp, D), x.dtype),
        grid_spec=pltpu.PrefetchScalarGridSpec(
            num_scalar_prefetch=0,
            grid=grid,
            in_specs=[
                pl.BlockSpec((tm, D), lambda i: (i, 0)),   # x row tile (pipelined)
                weight_spec((D, D)),                       # w1
                weight_spec((1, D)),                       # b1
                weight_spec((D, D)),                       # w2
                weight_spec((1, D)),                       # b2
            ],
            out_specs=pl.BlockSpec((tm, D), lambda i: (i, 0)),
        ),
        compiler_params=pltpu.CompilerParams(
            dimension_semantics=semantics,
            vmem_limit_bytes=_VMEM_LIMIT_BYTES,
        ),
        cost_estimate=cost,
    )(xp, w1, b1, w2, b2)

    if Mp != M:
        out = out[:M]
    return out.reshape(orig_shape)


if __name__ == "__main__":
    # Small shapes consistent with the module: nf == nx == 32 (residual add
    # requires matching feature dims), x: (batch=2, seq=8, nx=32).
    # Note: at this demo scale the kernel is latency-bound (per-call dispatch
    # dwarfs the math); benchmark at realistic M*D before tuning further.
    nx = nf = 32
    batch, seq = 2, 8

    key = jax.random.PRNGKey(0)
    k_x, k_w1, k_w2 = jax.random.split(key, 3)

    x = jax.random.normal(k_x, (batch, seq, nx), dtype=jnp.float32)
    # nn.init.normal_(w, std=0.02); biases zero-initialized.
    w1 = 0.02 * jax.random.normal(k_w1, (nx, nf), dtype=jnp.float32)
    b1 = jnp.zeros((nf,), dtype=jnp.float32)
    w2 = 0.02 * jax.random.normal(k_w2, (nx, nf), dtype=jnp.float32)
    b2 = jnp.zeros((nf,), dtype=jnp.float32)

    # Pure-JAX reference of the same math.
    x2d = x.reshape(-1, nx)
    h = jnp.maximum(x2d @ w1 + b1, 0.0)
    ref = (x2d + (h @ w2 + b2)).reshape(x.shape)

    # f32 path: one-time param prep, then the fused kernel.
    params_f32 = make_res_conv1d_params(w1, b1, w2, b2)
    out = res_conv1d(x, params_f32)
    jax.block_until_ready(out)
    assert out.shape == (batch, seq, nf)
    assert jnp.allclose(out, ref, atol=1e-5, rtol=1e-5)

    # bf16 MXU path: full-throughput matmuls, bf16-level deviation expected.
    params_bf16 = make_res_conv1d_params(w1, b1, w2, b2, compute_dtype=jnp.bfloat16)
    out_bf16 = res_conv1d(x.astype(jnp.bfloat16), params_bf16)
    jax.block_until_ready(out_bf16)
    assert out_bf16.shape == (batch, seq, nf)
    assert jnp.allclose(out_bf16.astype(jnp.float32), ref, atol=5e-2, rtol=5e-2)

    print("KERNEL_OK")
</pallas_src>

<mosaic_0001>
module attributes {stable_mosaic.version = 11 : i64} {
  func.func @_res_conv1d_kernel(%arg0: i32, %arg1: memref<16x32xf32, #tpu.memory_space<vmem>>, %arg2: memref<32x32xf32, #tpu.memory_space<vmem>>, %arg3: memref<1x32xf32, #tpu.memory_space<vmem>>, %arg4: memref<32x32xf32, #tpu.memory_space<vmem>>, %arg5: memref<1x32xf32, #tpu.memory_space<vmem>>, %arg6: memref<16x32xf32, #tpu.memory_space<vmem>>) attributes {dimension_semantics = [#tpu.dimension_semantics<parallel>], iteration_bounds = array<i64: 1>, scalar_prefetch = 0 : i64, scratch_operands = 0 : i64, tpu.core_type = #tpu.core_type<tc>, window_params = [{transform_indices = @transform_0, window_bounds = array<i64: 16, 32>}, {pipeline_mode = #tpu.pipeline_mode<synchronous>, transform_indices = @transform_1, window_bounds = array<i64: 32, 32>}, {pipeline_mode = #tpu.pipeline_mode<synchronous>, transform_indices = @transform_2, window_bounds = array<i64: 1, 32>}, {pipeline_mode = #tpu.pipeline_mode<synchronous>, transform_indices = @transform_3, window_bounds = array<i64: 32, 32>}, {pipeline_mode = #tpu.pipeline_mode<synchronous>, transform_indices = @transform_4, window_bounds = array<i64: 1, 32>}, {transform_indices = @transform_5, window_bounds = array<i64: 16, 32>}]} {
    %c0 = arith.constant 0 : index
    %c0_0 = arith.constant 0 : index
    %0 = vector.load %arg1[%c0, %c0_0] : memref<16x32xf32, #tpu.memory_space<vmem>>, vector<16x32xf32>
    %c0_1 = arith.constant 0 : index
    %c0_2 = arith.constant 0 : index
    %1 = vector.load %arg2[%c0_1, %c0_2] : memref<32x32xf32, #tpu.memory_space<vmem>>, vector<32x32xf32>
    %c0_3 = arith.constant 0 : index
    %c0_4 = arith.constant 0 : index
    %2 = vector.load %arg4[%c0_3, %c0_4] : memref<32x32xf32, #tpu.memory_space<vmem>>, vector<32x32xf32>
    %cst = arith.constant dense<0.000000e+00> : vector<16x32xf32>
    %3 = tpu.matmul %0, %1, %cst {dimension_numbers = #tpu.dot_dimension_numbers<[1], [0], [0], [1], [0, 0, 1, 1], [], []>} : vector<16x32xf32>, vector<32x32xf32>, vector<16x32xf32> -> vector<16x32xf32>
    %c0_5 = arith.constant 0 : index
    %c0_6 = arith.constant 0 : index
    %4 = vector.load %arg3[%c0_5, %c0_6] : memref<1x32xf32, #tpu.memory_space<vmem>>, vector<1x32xf32>
    %5 = vector.broadcast %4 : vector<1x32xf32> to vector<16x32xf32>
    %6 = arith.addf %3, %5 : vector<16x32xf32>
    %cst_7 = arith.constant 0.000000e+00 : f32
    %7 = vector.broadcast %cst_7 : f32 to vector<16x32xf32>
    %8 = arith.maximumf %6, %7 : vector<16x32xf32>
    %cst_8 = arith.constant dense<0.000000e+00> : vector<16x32xf32>
    %9 = tpu.matmul %8, %2, %cst_8 {dimension_numbers = #tpu.dot_dimension_numbers<[1], [0], [0], [1], [0, 0, 1, 1], [], []>} : vector<16x32xf32>, vector<32x32xf32>, vector<16x32xf32> -> vector<16x32xf32>
    %c0_9 = arith.constant 0 : index
    %c0_10 = arith.constant 0 : index
    %10 = vector.load %arg5[%c0_9, %c0_10] : memref<1x32xf32, #tpu.memory_space<vmem>>, vector<1x32xf32>
    %11 = vector.broadcast %10 : vector<1x32xf32> to vector<16x32xf32>
    %12 = arith.addf %9, %11 : vector<16x32xf32>
    %13 = arith.addf %0, %12 : vector<16x32xf32>
    %c0_11 = arith.constant 0 : index
    %c0_12 = arith.constant 0 : index
    %14 = vector.load %arg6[%c0_11, %c0_12] : memref<16x32xf32, #tpu.memory_space<vmem>>, vector<16x32xf32>
    tpu.vector_store %arg6[%c0_11, %c0_12], %13 {strides = array<i32>} : memref<16x32xf32, #tpu.memory_space<vmem>>, vector<16x32xf32>,
    return
  }
  func.func @transform_0(%arg0: i32) -> (i32, i32) {
    %c0_i32 = arith.constant 0 : i32
    %c0_i32_0 = arith.constant 0 : i32
    return %arg0, %c0_i32 : i32, i32
  }
  func.func @transform_1(%arg0: i32) -> (i32, i32) {
    %c0_i32 = arith.constant 0 : i32
    %c0_i32_0 = arith.constant 0 : i32
    %c0_i32_1 = arith.constant 0 : i32
    return %c0_i32, %c0_i32_0 : i32, i32
  }
  func.func @transform_2(%arg0: i32) -> (i32, i32) {
    %c0_i32 = arith.constant 0 : i32
    %c0_i32_0 = arith.constant 0 : i32
    %c0_i32_1 = arith.constant 0 : i32
    return %c0_i32, %c0_i32_0 : i32, i32
  }
  func.func @transform_3(%arg0: i32) -> (i32, i32) {
    %c0_i32 = arith.constant 0 : i32
    %c0_i32_0 = arith.constant 0 : i32
    %c0_i32_1 = arith.constant 0 : i32
    return %c0_i32, %c0_i32_0 : i32, i32
  }
  func.func @transform_4(%arg0: i32) -> (i32, i32) {
    %c0_i32 = arith.constant 0 : i32
    %c0_i32_0 = arith.constant 0 : i32
    %c0_i32_1 = arith.constant 0 : i32
    return %c0_i32, %c0_i32_0 : i32, i32
  }
  func.func @transform_5(%arg0: i32) -> (i32, i32) {
    %c0_i32 = arith.constant 0 : i32
    %c0_i32_0 = arith.constant 0 : i32
    return %arg0, %c0_i32 : i32, i32
  }
}

</mosaic_0001>

<llo_original>
// kernel: tpu_custom_call.1
$region0: #{tpu_custom_call.1}
  #allocation0 [shape = 'u32[]', space=smem, size = 0x4, offset = 0x4, fixed_abs, tag = 'smem constant byte address 0x4 - core index']
  #allocation1 [shape = 'u32[72,128]{1,0:T(1,128)}', space=vmem, size = 0x9000, scoped, tag = 'internal scratch']
  %s0 = inlined_call_operand.hbm [shape: f32[16,32], index: 0, kind: input, shape index: {}]
  %s1 = inlined_call_operand.hbm [shape: f32[32,32], index: 1, kind: input, shape index: {}]
  %s2 = inlined_call_operand.vmem [shape: f32[1,32], index: 2, kind: input, shape index: {}]
  %s3 = inlined_call_operand.hbm [shape: f32[32,32], index: 3, kind: input, shape index: {}]
  %s4 = inlined_call_operand.vmem [shape: f32[1,32], index: 4, kind: input, shape index: {}]
  %s5 = inlined_call_operand.hbm [shape: f32[16,32], index: 5, kind: output, shape index: {}]
  %s6 = sld [smem:[#allocation0]]
  $region42: #{tpu_custom_call.1} parent=0
    _
  %s8 = ssub.s32 1, %s6
  %s9 = scalar_select 0, %s8, %s6
  $region1: #{tpu_custom_call.1} parent=0
    #allocation2 [shape = 'u8[8192]{0}', space=vmem, size = 0x2000, scoped, tag = 'input window, operand 0, single buffered']
    #allocation3 [shape = 's32[1]{0}', space=sflag, size = 0x4, scoped, tag = 'scoped memory for tpu_custom_call.1']
    #allocation4 [shape = 's32[1]{0}', space=sflag, size = 0x4, scoped, tag = 'scoped memory for tpu_custom_call.1']
    #allocation5 [shape = 'u8[16384]{0}', space=vmem, size = 0x4000, scoped, tag = 'input window, operand 1, single buffered']
    #allocation6 [shape = 's32[1]{0}', space=sflag, size = 0x4, scoped, tag = 'scoped memory for tpu_custom_call.1']
    #allocation7 [shape = 'u8[16384]{0}', space=vmem, size = 0x4000, scoped, tag = 'input window, operand 3, single buffered']
    #allocation8 [shape = 'u8[8192]{0}', space=vmem, size = 0x2000, scoped, tag = 'output window, operand 0, single buffered']
    %10 = vsyncpa [#allocation3], 0
    %11 = vsyncpa [#allocation6], 0
    %12 = vsyncpa [#allocation4], 0
    // Predicated region
    $region2: #{tpu_custom_call.1} parent=1 // pred_check
      _
    $region3: #{tpu_custom_call.1} parent=1 // pred_check_branch
      %14 = sbr.rel (0) target = $region5
    $region4: #{tpu_custom_call.1} parent=1 // pred_region
      %16 = vsyncadd [#allocation3], 0
      %s17 = sshll.u32 %s0, 4
      %s18 = int_to_ptr.hbm [resolvable:$true] %s17
      %s19 = sshll.u32 [#allocation2], 4
      %s20 = int_to_ptr.vmem [resolvable:$true] %s19
      %25 = dma.hbm_to_vmem [thread:$0]  %s18, 256, %s20, [#allocation3], 128, 128, 8
    $region5: #{tpu_custom_call.1} parent=1 // pred_fallthru
      _
    // Predicated region
    $region6: #{tpu_custom_call.1} parent=1 // pred_check
      _
    $region7: #{tpu_custom_call.1} parent=1 // pred_check_branch
      %27 = sbr.rel (0) target = $region9
    $region8: #{tpu_custom_call.1} parent=1 // pred_region
      %29 = vsyncadd [#allocation6], 0
      %s30 = sshll.u32 %s1, 4
      %s31 = int_to_ptr.hbm [resolvable:$true] %s30
      %s32 = sshll.u32 [#allocation5], 4
      %s33 = int_to_ptr.vmem [resolvable:$true] %s32
      %38 = dma.hbm_to_vmem [thread:$0]  %s31, 512, %s33, [#allocation6], 128, 128, 8
    $region9: #{tpu_custom_call.1} parent=1 // pred_fallthru
      _
    // Predicated region
    $region10: #{tpu_custom_call.1} parent=1 // pred_check
      _
    $region11: #{tpu_custom_call.1} parent=1 // pred_check_branch
      %40 = sbr.rel (0) target = $region13
    $region12: #{tpu_custom_call.1} parent=1 // pred_region
      _
    $region13: #{tpu_custom_call.1} parent=1 // pred_fallthru
      _
    // Predicated region
    $region14: #{tpu_custom_call.1} parent=1 // pred_check
      _
    $region15: #{tpu_custom_call.1} parent=1 // pred_check_branch
      %42 = sbr.rel (0) target = $region17
    $region16: #{tpu_custom_call.1} parent=1 // pred_region
      %44 = vsyncadd [#allocation6], 0
      %s45 = sshll.u32 %s3, 4
      %s46 = int_to_ptr.hbm [resolvable:$true] %s45
      %s47 = sshll.u32 [#allocation7], 4
      %s48 = int_to_ptr.vmem [resolvable:$true] %s47
      %53 = dma.hbm_to_vmem [thread:$0]  %s46, 512, %s48, [#allocation6], 128, 128, 8
    $region17: #{tpu_custom_call.1} parent=1 // pred_fallthru
      _
    // Predicated region
    $region18: #{tpu_custom_call.1} parent=1 // pred_check
      _
    $region19: #{tpu_custom_call.1} parent=1 // pred_check_branch
      %55 = sbr.rel (0) target = $region21
    $region20: #{tpu_custom_call.1} parent=1 // pred_region
      _
    $region21: #{tpu_custom_call.1} parent=1 // pred_fallthru
      _
    // Predicated region
    $region22: #{tpu_custom_call.1} parent=1 // pred_check
      _
    $region23: #{tpu_custom_call.1} parent=1 // pred_check_branch
      %57 = sbr.rel (0) target = $region25
    $region24: #{tpu_custom_call.1} parent=1 // pred_region
      %59 = dma.done [#allocation3], 256
    $region25: #{tpu_custom_call.1} parent=1 // pred_fallthru
      _
    // Predicated region
    $region26: #{tpu_custom_call.1} parent=1 // pred_check
      _
    $region27: #{tpu_custom_call.1} parent=1 // pred_check_branch
      %61 = sbr.rel (0) target = $region29
    $region28: #{tpu_custom_call.1} parent=1 // pred_region
      %63 = dma.done [#allocation6], 512
    $region29: #{tpu_custom_call.1} parent=1 // pred_fallthru
      _
    // Predicated region
    $region30: #{tpu_custom_call.1} parent=1 // pred_check
      _
    $region31: #{tpu_custom_call.1} parent=1 // pred_check_branch
      %65 = sbr.rel (0) target = $region33
    $region32: #{tpu_custom_call.1} parent=1 // pred_region
      %67 = dma.done [#allocation6], 512
    $region33: #{tpu_custom_call.1} parent=1 // pred_fallthru
      _
    %v68 = vld [vmem:[#allocation2] sm:$0xff]
    %v69 = vld [vmem:[#allocation2 + $0x8] sm:$0xff]
    %v70 = vld [vmem:[#allocation5] sm:$0xff]
    %v71 = vld [vmem:[#allocation5 + $0x8] sm:$0xff]
    %v72 = vld [vmem:[#allocation5 + $0x10] sm:$0xff]
    %v73 = vld [vmem:[#allocation5 + $0x18] sm:$0xff]
    %v74 = vld [vmem:[#allocation7] sm:$0xff]
    %v75 = vld [vmem:[#allocation7 + $0x8] sm:$0xff]
    %v76 = vld [vmem:[#allocation7 + $0x10] sm:$0xff]
    %v77 = vld [vmem:[#allocation7 + $0x18] sm:$0xff]
    %v78 = vld [vmem:[%s2] sm:$0x1]
    %v80 = vperm.slane %v78, 0
    %vm82 = vcmask 261120
    %v84 = vsel %vm82, %v68, 0
    %v87 = vsel %vm82, %v69, 0
    %89 = vmatpush.msra.mxu0 0.0
    %90 = vmatpush.msra.mxu0 0.0
    %91 = vmatpush.msra.mxu0 0.0
    %92 = vmatpush.msra.mxu0 0.0
    %93 = vmatpush.msra.mxu0 0.0
    %94 = vmatpush.msra.mxu0 0.0
    %95 = vmatpush.msra.mxu0 0.0
    %96 = vmatpush.msra.mxu0 0.0
    %97 = vmatpush.msra.mxu0 0.0
    %98 = vmatpush.msra.mxu0 0.0
    %99 = vmatpush.msra.mxu0 0.0
    %100 = vmatpush.msra.mxu0 0.0
    %101 = vmatpush.msra.mxu0 %v73
    %102 = vmatpush.msra.mxu0 %v72
    %103 = vmatpush.msra.mxu0 %v71
    %104 = vmatpush.msra.mxu0 %v70
    %105 = vmatmul.f32.gmra.mxu0 %v84
    %v106 = vpop.f32.mrf.mxu0
    %v107 = vadd.f32 %v80, %v106
    %108 = vmatmul.f32.gmra.mxu0 %v87
    %v109 = vpop.f32.mrf.mxu0
    %v110 = vadd.f32 %v80, %v109
    %111 = vdwg.mxu0
    %v112 = vmax.f32 %v107, 0.0
    %v113 = vmax.f32 %v110, 0.0
    %v114 = vld [vmem:[%s4] sm:$0x1]
    %v116 = vperm.slane %v114, 0
    %v119 = vsel %vm82, %v112, 0
    %v122 = vsel %vm82, %v113, 0
    %124 = vmatpush.msra.mxu0 0.0
    %125 = vmatpush.msra.mxu0 0.0
    %126 = vmatpush.msra.mxu0 0.0
    %127 = vmatpush.msra.mxu0 0.0
    %128 = vmatpush.msra.mxu0 0.0
    %129 = vmatpush.msra.mxu0 0.0
    %130 = vmatpush.msra.mxu0 0.0
    %131 = vmatpush.msra.mxu0 0.0
    %132 = vmatpush.msra.mxu0 0.0
    %133 = vmatpush.msra.mxu0 0.0
    %134 = vmatpush.msra.mxu0 0.0
    %135 = vmatpush.msra.mxu0 0.0
    %136 = vmatpush.msra.mxu0 %v77
    %137 = vmatpush.msra.mxu0 %v76
    %138 = vmatpush.msra.mxu0 %v75
    %139 = vmatpush.msra.mxu0 %v74
    %140 = vmatmul.f32.gmra.mxu0 %v119
    %v141 = vpop.f32.mrf.mxu0
    %v142 = vadd.f32 %v116, %v141
    %143 = vmatmul.f32.gmra.mxu0 %v122
    %v144 = vpop.f32.mrf.mxu0
    %v145 = vadd.f32 %v116, %v144
    %146 = vdwg.mxu0
    %v147 = vadd.f32 %v68, %v142
    %v148 = vadd.f32 %v69, %v145
    %149 = vst.msk [vmem:[#allocation8] sm:$0xff] %vm82, %v147
    %150 = vst.msk [vmem:[#allocation8 + $0x8] sm:$0xff] %vm82, %v148
    // Predicated region
    $region34: #{tpu_custom_call.1} parent=1 // pred_check
      _
    $region35: #{tpu_custom_call.1} parent=1 // pred_check_branch
      %152 = sbr.rel (0) target = $region37
    $region36: #{tpu_custom_call.1} parent=1 // pred_region
      %154 = vsyncadd [#allocation4], 0
      %s155 = sshll.u32 [#allocation8], 4
      %s156 = int_to_ptr.vmem [resolvable:$true] %s155
      %s157 = sshll.u32 %s5, 4
      %s158 = int_to_ptr.hbm [resolvable:$true] %s157
      %163 = dma.vmem_to_hbm [thread:$0]  %s156, 256, %s158, [#allocation4], 128, 128, 8
    $region37: #{tpu_custom_call.1} parent=1 // pred_fallthru
      _
    // Predicated region
    $region38: #{tpu_custom_call.1} parent=1 // pred_check
      _
    $region39: #{tpu_custom_call.1} parent=1 // pred_check_branch
      %165 = sbr.rel (0) target = $region41
    $region40: #{tpu_custom_call.1} parent=1 // pred_region
      %167 = dma.done [#allocation4], 256
    $region41: #{tpu_custom_call.1} parent=1 // pred_fallthru
      _
    %168 = vsyncpa [#allocation3], 1
    %169 = vsyncpa [#allocation6], 1
    %170 = vsyncpa [#allocation4], 1

</llo_original>
